<compile_context>
chip_gen: v6e
topology: v6e:2x2x1
jax: 0.10.0
libtpu: 0.0.40
codegen_flags: <defaults>
</compile_context>

<pallas_src>
import functools

import jax
import jax.numpy as jnp
from jax.experimental import pallas as pl
from jax.experimental.pallas import tpu as pltpu


def _round_up(x, m):
    return ((x + m - 1) // m) * m


# --------------------------------------------------------------------------- #
# Kernel
# --------------------------------------------------------------------------- #
def vsfd_kernel(vis_ref, gsrm_ref, w1v_ref, w1g_ref, b1_ref, w2_ref, b2_ref,
                out_ref, *, mix_bf16):
    vis = vis_ref[...]           # (tm, Hp) bf16
    gsrm = gsrm_ref[...]         # (tm, Hp) bf16

    # fc_fusion: two MXU dots into a single fp32 accumulator
    # (== concat([vis, gsrm]) @ W1), bias added on the fp32 accumulator.
    fuse = jnp.dot(vis, w1v_ref[...], preferred_element_type=jnp.float32)
    fuse = fuse + jnp.dot(gsrm, w1g_ref[...],
                          preferred_element_type=jnp.float32)
    fuse = fuse + b1_ref[...]

    # sigmoid(x) == 0.5 * tanh(0.5 x) + 0.5 : single EUP push (no exp+divide).
    gate = 0.5 * jnp.tanh(0.5 * fuse) + 0.5

    # gate*vis + (1-gate)*gsrm == gsrm + gate*(vis - gsrm)   (3 VPU ops)
    if mix_bf16:
        # v6e/v7x: packed bf16 VALU, result feeds a bf16 MXU dot anyway.
        fused = gsrm + gate.astype(jnp.bfloat16) * (vis - gsrm)
    else:
        vis32 = vis.astype(jnp.float32)
        gsrm32 = gsrm.astype(jnp.float32)
        fused = (gsrm32 + gate * (vis32 - gsrm32)).astype(jnp.bfloat16)

    # fc_pred: bf16 MXU operands, fp32 accumulator + bias.
    out = jnp.dot(fused, w2_ref[...], preferred_element_type=jnp.float32)
    out = out + b2_ref[...]
    out_ref[...] = out.astype(out_ref.dtype)


# --------------------------------------------------------------------------- #
# Tiling / hardware-aware sizing
# --------------------------------------------------------------------------- #
def _tpu_caps():
    """(vmem_capacity_bytes, is_v7, bf16_valu) with conservative fallbacks."""
    kind = ""
    try:
        kind = jax.devices()[0].device_kind.lower()
    except Exception:
        pass
    is_v7 = "v7" in kind
    bf16_valu = ("v6" in kind) or is_v7

    vmem_cap = 0
    try:
        vmem_cap = int(getattr(pltpu.get_tpu_info(),
                               "vmem_capacity_bytes", 0) or 0)
    except Exception:
        vmem_cap = 0
    if vmem_cap <= 0:
        if is_v7:
            vmem_cap = 64 << 20
        elif ("v4" in kind) or ("v5" in kind) or ("v6" in kind):
            vmem_cap = 128 << 20
        elif ("v2" in kind) or ("v3" in kind):
            vmem_cap = 16 << 20
        else:
            vmem_cap = 64 << 20          # unknown -> conservative
    return vmem_cap, is_v7, bf16_valu


def _pick_tn(cp):
    """Column tile over the (padded) class dim; cp is a multiple of 128."""
    if cp <= 1024:
        return cp
    for t in (1024, 512, 256, 128):
        if cp % t == 0:
            return t
    return 128


def _pick_tm(n, hp, cp, tn, budget, start_tm, ensure_two_steps):
    """Largest row tile that fits the VMEM budget (inputs double-buffered,
    weights single-copy, fp32 elementwise temporaries accounted)."""
    tm = min(start_tm, _round_up(max(n, 1), 8))
    tm = max(8, _round_up(tm, 8))

    def bytes_needed(t):
        act_in = 2 * 2 * t * hp * 2            # vis + gsrm bf16, double-buffered
        act_out = 2 * t * tn * 4               # fp32 out tile, double-buffered
        w = 2 * hp * hp * 2 + hp * 4           # W1 halves (bf16) + b1, resident
        if tn == cp:
            w += hp * cp * 2 + cp * 4          # W2 + b2 fully resident
        else:
            w += 2 * (hp * tn * 2 + tn * 4)    # W2/b2 column tiles, double-buffered
        interm = 6 * t * hp * 4 + 2 * t * tn * 4   # fuse/gate/mix + accumulator
        return act_in + act_out + w + interm

    while tm > 8 and bytes_needed(tm) > budget:
        tm -= 8

    # v7x: 2 TensorCores per chip -- keep the "parallel" row axis >= 2 steps.
    if ensure_two_steps and n > 8 and -(-n // tm) < 2:
        tm = max(8, _round_up(-(-n // 2), 8))
    return tm


# --------------------------------------------------------------------------- #
# Host wrappers
# --------------------------------------------------------------------------- #
def prepare_vsfd_params(params):
    """One-time weight prep (do NOT call per forward step).

    params = (w1, b1, w2, b2) in (in, out) layout:
      w1: (2H, H), rows [0:H] multiply the visual half, [H:2H] the gsrm half
      b1: (H,)   w2: (H, C)   b2: (C,)
    Returns zero-padded, lane-dense, bf16 weights + fp32 biases.
    """
    w1, b1, w2, b2 = params
    H = w1.shape[1]
    C = w2.shape[1]
    Hp = _round_up(H, 128)
    Cp = _round_up(C, 128)
    w1v = jnp.pad(w1[:H], ((0, Hp - H), (0, Hp - H))).astype(jnp.bfloat16)
    w1g = jnp.pad(w1[H:], ((0, Hp - H), (0, Hp - H))).astype(jnp.bfloat16)
    b1p = jnp.pad(b1, (0, Hp - H)).reshape(1, Hp).astype(jnp.float32)
    w2p = jnp.pad(w2, ((0, Hp - H), (0, Cp - C))).astype(jnp.bfloat16)
    b2p = jnp.pad(b2, (0, Cp - C)).reshape(1, Cp).astype(jnp.float32)
    return (w1v, w1g, b1p, w2p, b2p)


@functools.partial(jax.jit, static_argnames=("num_classes",))
def vsfd_forward(aligned_visual_feature, gsrm_feature, prepared_params, *,
                 num_classes):
    """aligned_visual_feature, gsrm_feature: [B, T, H] float32."""
    w1v, w1g, b1p, w2p, b2p = prepared_params
    B, T, H = aligned_visual_feature.shape
    N = B * T
    Hp = w1v.shape[0]
    Cp = w2p.shape[1]
    C = num_classes

    vmem_cap, is_v7, bf16_valu = _tpu_caps()
    budget = int(vmem_cap * 0.55)                       # _pick_tm budget
    vmem_limit = min(int(vmem_cap * 0.70), 100 << 20)   # explicit scoped limit

    tn = _pick_tn(Cp)
    nj = Cp // tn
    start_tm = 512 if vmem_cap <= (64 << 20) else 1024
    tm = _pick_tm(N, Hp, Cp, tn, budget, start_tm,
                  ensure_two_steps=(is_v7 and nj == 1))
    N_pad = _round_up(N, tm)
    ni = N_pad // tm

    # Cast to bf16 BEFORE padding (half the bytes in the XLA pad preamble).
    vis2d = aligned_visual_feature.reshape(N, H).astype(jnp.bfloat16)
    gsrm2d = gsrm_feature.reshape(N, H).astype(jnp.bfloat16)
    vis_p = jnp.pad(vis2d, ((0, N_pad - N), (0, Hp - H)))
    gsrm_p = jnp.pad(gsrm2d, ((0, N_pad - N), (0, Hp - H)))

    # Grid-invariant operands: whole-array VMEM residency (single copy, no
    # per-step re-DMA / double buffering).
    def resident():
        return pl.BlockSpec(memory_space=pltpu.MemorySpace.VMEM)

    if nj == 1:
        w2_spec = resident()
        b2_spec = resident()
    else:
        w2_spec = pl.BlockSpec((Hp, tn), lambda i, j: (0, j))
        b2_spec = pl.BlockSpec((1, tn), lambda i, j: (0, j))

    out2d = pl.pallas_call(
        functools.partial(vsfd_kernel, mix_bf16=bf16_valu),
        out_shape=jax.ShapeDtypeStruct((N_pad, Cp), jnp.float32),
        grid_spec=pltpu.PrefetchScalarGridSpec(
            num_scalar_prefetch=0,
            grid=(ni, nj),
            in_specs=[
                pl.BlockSpec((tm, Hp), lambda i, j: (i, 0)),   # visual rows
                pl.BlockSpec((tm, Hp), lambda i, j: (i, 0)),   # gsrm rows
                resident(),                                    # W1 visual half
                resident(),                                    # W1 gsrm half
                resident(),                                    # b1
                w2_spec,                                       # W2
                b2_spec,                                       # b2
            ],
            out_specs=pl.BlockSpec((tm, tn), lambda i, j: (i, j)),
        ),
        compiler_params=pltpu.CompilerParams(
            dimension_semantics=("parallel", "parallel"),
            vmem_limit_bytes=vmem_limit,
        ),
    )(vis_p, gsrm_p, w1v, w1g, b1p, w2p, b2p)

    # Note: could return the padded (N_pad, Cp) slab / bf16 output if the
    # downstream consumer tolerates it; keep fp32 + slice for exactness here.
    return out2d[:N, :C].reshape(B, T, C)


# --------------------------------------------------------------------------- #
# Reference / params
# --------------------------------------------------------------------------- #
def init_params(key, hidden_size, num_classes):
    """PyTorch Linear stores (out, in); we keep the transposed (in, out) form.
    fc_fusion weight rows [0:H] multiply the visual half, [H:2H] the gsrm half."""
    k1, k2, k3, k4 = jax.random.split(key, 4)
    H, C = hidden_size, num_classes
    w1_t = jax.random.normal(k1, (2 * H, H), jnp.float32) * 0.05   # (in, out)
    b1 = jax.random.normal(k2, (H,), jnp.float32) * 0.05
    w2_t = jax.random.normal(k3, (H, C), jnp.float32) * 0.05       # (in, out)
    b2 = jax.random.normal(k4, (C,), jnp.float32) * 0.05
    return (w1_t, b1, w2_t, b2)


def vsfd_reference(vis, gsrm, params):
    """fp32 reference matching the PyTorch forward."""
    w1, b1, w2, b2 = params
    x = jnp.concatenate([vis, gsrm], axis=-1)
    fuse = x @ w1 + b1
    g = jax.nn.sigmoid(fuse)
    fused = g * vis + (1.0 - g) * gsrm
    return fused @ w2 + b2


if __name__ == "__main__":
    B, T, H, C = 2, 8, 32, 40
    key = jax.random.PRNGKey(0)
    kv, kg, kp = jax.random.split(key, 3)

    aligned_visual_feature = jax.random.normal(kv, (B, T, H), jnp.float32)
    gsrm_feature = jax.random.normal(kg, (B, T, H), jnp.float32)
    params = init_params(kp, H, C)
    prepared = prepare_vsfd_params(params)       # pad/cast weights ONCE

    out = vsfd_forward(aligned_visual_feature, gsrm_feature, prepared,
                       num_classes=C)
    out = jax.block_until_ready(out)

    ref = vsfd_reference(aligned_visual_feature, gsrm_feature, params)
    assert out.shape == (B, T, C)
    # bf16 MXU operands with fp32 accumulation -> compare against the fp32
    # reference with a bf16-appropriate tolerance.
    max_err = float(jnp.max(jnp.abs(out - ref)))
    assert jnp.allclose(out, ref, atol=2e-2, rtol=2e-2), max_err

    print("KERNEL_OK")
</pallas_src>

<mosaic_0001>
module attributes {stable_mosaic.version = 11 : i64} {
  func.func @vsfd_kernel(%arg0: i32, %arg1: i32, %arg2: memref<16x128xbf16, #tpu.memory_space<vmem>>, %arg3: memref<16x128xbf16, #tpu.memory_space<vmem>>, %arg4: memref<128x128xbf16, #tpu.memory_space<vmem>>, %arg5: memref<128x128xbf16, #tpu.memory_space<vmem>>, %arg6: memref<1x128xf32, #tpu.memory_space<vmem>>, %arg7: memref<128x128xbf16, #tpu.memory_space<vmem>>, %arg8: memref<1x128xf32, #tpu.memory_space<vmem>>, %arg9: memref<16x128xf32, #tpu.memory_space<vmem>>) attributes {dimension_semantics = [#tpu.dimension_semantics<parallel>, #tpu.dimension_semantics<parallel>], iteration_bounds = array<i64: 1, 1>, scalar_prefetch = 0 : i64, scratch_operands = 0 : i64, tpu.core_type = #tpu.core_type<tc>, window_params = [{transform_indices = @transform_0, window_bounds = array<i64: 16, 128>}, {transform_indices = @transform_1, window_bounds = array<i64: 16, 128>}, {pipeline_mode = #tpu.pipeline_mode<synchronous>, transform_indices = @transform_2, window_bounds = array<i64: 128, 128>}, {pipeline_mode = #tpu.pipeline_mode<synchronous>, transform_indices = @transform_3, window_bounds = array<i64: 128, 128>}, {pipeline_mode = #tpu.pipeline_mode<synchronous>, transform_indices = @transform_4, window_bounds = array<i64: 1, 128>}, {pipeline_mode = #tpu.pipeline_mode<synchronous>, transform_indices = @transform_5, window_bounds = array<i64: 128, 128>}, {pipeline_mode = #tpu.pipeline_mode<synchronous>, transform_indices = @transform_6, window_bounds = array<i64: 1, 128>}, {transform_indices = @transform_7, window_bounds = array<i64: 16, 128>}]} {
    %c0 = arith.constant 0 : index
    %c0_0 = arith.constant 0 : index
    %0 = vector.load %arg2[%c0, %c0_0] : memref<16x128xbf16, #tpu.memory_space<vmem>>, vector<16x128xbf16>
    %c0_1 = arith.constant 0 : index
    %c0_2 = arith.constant 0 : index
    %1 = vector.load %arg3[%c0_1, %c0_2] : memref<16x128xbf16, #tpu.memory_space<vmem>>, vector<16x128xbf16>
    %c0_3 = arith.constant 0 : index
    %c0_4 = arith.constant 0 : index
    %2 = vector.load %arg4[%c0_3, %c0_4] : memref<128x128xbf16, #tpu.memory_space<vmem>>, vector<128x128xbf16>
    %cst = arith.constant dense<0.000000e+00> : vector<16x128xf32>
    %3 = tpu.matmul %0, %2, %cst {dimension_numbers = #tpu.dot_dimension_numbers<[1], [0], [0], [1], [0, 0, 1, 1], [], []>} : vector<16x128xbf16>, vector<128x128xbf16>, vector<16x128xf32> -> vector<16x128xf32>
    %c0_5 = arith.constant 0 : index
    %c0_6 = arith.constant 0 : index
    %4 = vector.load %arg5[%c0_5, %c0_6] : memref<128x128xbf16, #tpu.memory_space<vmem>>, vector<128x128xbf16>
    %cst_7 = arith.constant dense<0.000000e+00> : vector<16x128xf32>
    %5 = tpu.matmul %1, %4, %cst_7 {dimension_numbers = #tpu.dot_dimension_numbers<[1], [0], [0], [1], [0, 0, 1, 1], [], []>} : vector<16x128xbf16>, vector<128x128xbf16>, vector<16x128xf32> -> vector<16x128xf32>
    %6 = arith.addf %3, %5 : vector<16x128xf32>
    %c0_8 = arith.constant 0 : index
    %c0_9 = arith.constant 0 : index
    %7 = vector.load %arg6[%c0_8, %c0_9] : memref<1x128xf32, #tpu.memory_space<vmem>>, vector<1x128xf32>
    %8 = vector.broadcast %7 : vector<1x128xf32> to vector<16x128xf32>
    %9 = arith.addf %6, %8 : vector<16x128xf32>
    %cst_10 = arith.constant 5.000000e-01 : f32
    %10 = vector.broadcast %cst_10 : f32 to vector<16x128xf32>
    %11 = arith.mulf %10, %9 : vector<16x128xf32>
    %12 = math.tanh %11 : vector<16x128xf32>
    %cst_11 = arith.constant 5.000000e-01 : f32
    %13 = vector.broadcast %cst_11 : f32 to vector<16x128xf32>
    %14 = arith.mulf %13, %12 : vector<16x128xf32>
    %cst_12 = arith.constant 5.000000e-01 : f32
    %15 = vector.broadcast %cst_12 : f32 to vector<16x128xf32>
    %16 = arith.addf %14, %15 : vector<16x128xf32>
    %17 = arith.extf %0 : vector<16x128xbf16> to vector<16x128xf32>
    %18 = arith.extf %1 : vector<16x128xbf16> to vector<16x128xf32>
    %19 = arith.subf %17, %18 : vector<16x128xf32>
    %20 = arith.mulf %16, %19 : vector<16x128xf32>
    %21 = arith.addf %18, %20 : vector<16x128xf32>
    %22 = arith.truncf %21 : vector<16x128xf32> to vector<16x128xbf16>
    %c0_13 = arith.constant 0 : index
    %c0_14 = arith.constant 0 : index
    %23 = vector.load %arg7[%c0_13, %c0_14] : memref<128x128xbf16, #tpu.memory_space<vmem>>, vector<128x128xbf16>
    %cst_15 = arith.constant dense<0.000000e+00> : vector<16x128xf32>
    %24 = tpu.matmul %22, %23, %cst_15 {dimension_numbers = #tpu.dot_dimension_numbers<[1], [0], [0], [1], [0, 0, 1, 1], [], []>} : vector<16x128xbf16>, vector<128x128xbf16>, vector<16x128xf32> -> vector<16x128xf32>
    %c0_16 = arith.constant 0 : index
    %c0_17 = arith.constant 0 : index
    %25 = vector.load %arg8[%c0_16, %c0_17] : memref<1x128xf32, #tpu.memory_space<vmem>>, vector<1x128xf32>
    %26 = vector.broadcast %25 : vector<1x128xf32> to vector<16x128xf32>
    %27 = arith.addf %24, %26 : vector<16x128xf32>
    %c0_18 = arith.constant 0 : index
    %c0_19 = arith.constant 0 : index
    %28 = vector.load %arg9[%c0_18, %c0_19] : memref<16x128xf32, #tpu.memory_space<vmem>>, vector<16x128xf32>
    tpu.vector_store %arg9[%c0_18, %c0_19], %27 {strides = array<i32>} : memref<16x128xf32, #tpu.memory_space<vmem>>, vector<16x128xf32>,
    return
  }
  func.func @transform_0(%arg0: i32, %arg1: i32) -> (i32, i32) {
    %c0_i32 = arith.constant 0 : i32
    %c0_i32_0 = arith.constant 0 : i32
    return %arg0, %c0_i32 : i32, i32
  }
  func.func @transform_1(%arg0: i32, %arg1: i32) -> (i32, i32) {
    %c0_i32 = arith.constant 0 : i32
    %c0_i32_0 = arith.constant 0 : i32
    return %arg0, %c0_i32 : i32, i32
  }
  func.func @transform_2(%arg0: i32, %arg1: i32) -> (i32, i32) {
    %c0_i32 = arith.constant 0 : i32
    %c0_i32_0 = arith.constant 0 : i32
    %c0_i32_1 = arith.constant 0 : i32
    return %c0_i32, %c0_i32_0 : i32, i32
  }
  func.func @transform_3(%arg0: i32, %arg1: i32) -> (i32, i32) {
    %c0_i32 = arith.constant 0 : i32
    %c0_i32_0 = arith.constant 0 : i32
    %c0_i32_1 = arith.constant 0 : i32
    return %c0_i32, %c0_i32_0 : i32, i32
  }
  func.func @transform_4(%arg0: i32, %arg1: i32) -> (i32, i32) {
    %c0_i32 = arith.constant 0 : i32
    %c0_i32_0 = arith.constant 0 : i32
    %c0_i32_1 = arith.constant 0 : i32
    return %c0_i32, %c0_i32_0 : i32, i32
  }
  func.func @transform_5(%arg0: i32, %arg1: i32) -> (i32, i32) {
    %c0_i32 = arith.constant 0 : i32
    %c0_i32_0 = arith.constant 0 : i32
    %c0_i32_1 = arith.constant 0 : i32
    return %c0_i32, %c0_i32_0 : i32, i32
  }
  func.func @transform_6(%arg0: i32, %arg1: i32) -> (i32, i32) {
    %c0_i32 = arith.constant 0 : i32
    %c0_i32_0 = arith.constant 0 : i32
    %c0_i32_1 = arith.constant 0 : i32
    return %c0_i32, %c0_i32_0 : i32, i32
  }
  func.func @transform_7(%arg0: i32, %arg1: i32) -> (i32, i32) {
    %c0_i32 = arith.constant 0 : i32
    return %arg0, %arg1 : i32, i32
  }
}

</mosaic_0001>

<llo_original>
// kernel: vsfd_forward.1
$region0: #{vsfd_forward.1}
  #allocation0 [shape = 'u32[]', space=smem, size = 0x4, offset = 0x4, fixed_abs, tag = 'smem constant byte address 0x4 - core index']
  #allocation1 [shape = 'u32[144,128]{1,0:T(1,128)}', space=vmem, size = 0x12000, scoped, tag = 'internal scratch']
  %s0 = inlined_call_operand.vmem [shape: bf16[16,128], index: 0, kind: input, shape index: {}]
  %s1 = inlined_call_operand.vmem [shape: bf16[16,128], index: 1, kind: input, shape index: {}]
  %s2 = inlined_call_operand.vmem [shape: bf16[128,128], index: 2, kind: input, shape index: {}]
  %s3 = inlined_call_operand.hbm [shape: bf16[128,128], index: 3, kind: input, shape index: {}]
  %s4 = inlined_call_operand.vmem [shape: f32[1,128], index: 4, kind: input, shape index: {}]
  %s5 = inlined_call_operand.hbm [shape: bf16[128,128], index: 5, kind: input, shape index: {}]
  %s6 = inlined_call_operand.vmem [shape: f32[1,128], index: 6, kind: input, shape index: {}]
  %s7 = inlined_call_operand.vmem [shape: f32[16,128], index: 7, kind: output, shape index: {}]
  %s8 = sld [smem:[#allocation0]]
  $region46: #{vsfd_forward.1} parent=0
    _
  %s10 = ssub.s32 1, %s8
  %s11 = scalar_select 0, %s10, %s8
  $region1: #{vsfd_forward.1} parent=0
    #allocation2 [shape = 'u8[32768]{0}', space=vmem, size = 0x8000, scoped, tag = 'input window, operand 3, single buffered']
    #allocation3 [shape = 's32[1]{0}', space=sflag, size = 0x4, scoped, tag = 'scoped memory for vsfd_forward.1']
    #allocation4 [shape = 'u8[32768]{0}', space=vmem, size = 0x8000, scoped, tag = 'input window, operand 5, single buffered']
    #allocation5 [shape = 's32[1]{0}', space=sflag, size = 0x4, scoped, tag = 'scoped memory for vsfd_forward.1']
    %12 = vsyncpa [#allocation3], 0
    %13 = vsyncpa [#allocation5], 0
    // Predicated region
    $region2: #{vsfd_forward.1} parent=1 // pred_check
      _
    $region3: #{vsfd_forward.1} parent=1 // pred_check_branch
      %15 = sbr.rel (0) target = $region5
    $region4: #{vsfd_forward.1} parent=1 // pred_region
      _
    $region5: #{vsfd_forward.1} parent=1 // pred_fallthru
      _
    // Predicated region
    $region6: #{vsfd_forward.1} parent=1 // pred_check
      _
    $region7: #{vsfd_forward.1} parent=1 // pred_check_branch
      %17 = sbr.rel (0) target = $region9
    $region8: #{vsfd_forward.1} parent=1 // pred_region
      _
    $region9: #{vsfd_forward.1} parent=1 // pred_fallthru
      _
    // Predicated region
    $region10: #{vsfd_forward.1} parent=1 // pred_check
      _
    $region11: #{vsfd_forward.1} parent=1 // pred_check_branch
      %19 = sbr.rel (0) target = $region13
    $region12: #{vsfd_forward.1} parent=1 // pred_region
      _
    $region13: #{vsfd_forward.1} parent=1 // pred_fallthru
      _
    // Predicated region
    $region14: #{vsfd_forward.1} parent=1 // pred_check
      _
    $region15: #{vsfd_forward.1} parent=1 // pred_check_branch
      %21 = sbr.rel (0) target = $region17
    $region16: #{vsfd_forward.1} parent=1 // pred_region
      %s23 = ssub.s32 1024, 1024
      %24 = vsyncadd [#allocation3], %s23
      %s25 = sshll.u32 [#allocation2], 4
      %s26 = int_to_ptr.vmem [resolvable:$true] %s25
      %31 = dma.hbm_to_vmem [thread:$0]  %s3, 1024, %s26, [#allocation3], 64, 64, 4
    $region17: #{vsfd_forward.1} parent=1 // pred_fallthru
      _
    // Predicated region
    $region18: #{vsfd_forward.1} parent=1 // pred_check
      _
    $region19: #{vsfd_forward.1} parent=1 // pred_check_branch
      %33 = sbr.rel (0) target = $region21
    $region20: #{vsfd_forward.1} parent=1 // pred_region
      _
    $region21: #{vsfd_forward.1} parent=1 // pred_fallthru
      _
    // Predicated region
    $region22: #{vsfd_forward.1} parent=1 // pred_check
      _
    $region23: #{vsfd_forward.1} parent=1 // pred_check_branch
      %35 = sbr.rel (0) target = $region25
    $region24: #{vsfd_forward.1} parent=1 // pred_region
      %s37 = ssub.s32 1024, 1024
      %38 = vsyncadd [#allocation5], %s37
      %s39 = sshll.u32 [#allocation4], 4
      %s40 = int_to_ptr.vmem [resolvable:$true] %s39
      %45 = dma.hbm_to_vmem [thread:$0]  %s5, 1024, %s40, [#allocation5], 64, 64, 4
    $region25: #{vsfd_forward.1} parent=1 // pred_fallthru
      _
    // Predicated region
    $region26: #{vsfd_forward.1} parent=1 // pred_check
      _
    $region27: #{vsfd_forward.1} parent=1 // pred_check_branch
      %47 = sbr.rel (0) target = $region29
    $region28: #{vsfd_forward.1} parent=1 // pred_region
      _
    $region29: #{vsfd_forward.1} parent=1 // pred_fallthru
      _
    // Predicated region
    $region30: #{vsfd_forward.1} parent=1 // pred_check
      _
    $region31: #{vsfd_forward.1} parent=1 // pred_check_branch
      %49 = sbr.rel (0) target = $region33
    $region32: #{vsfd_forward.1} parent=1 // pred_region
      %50 = dma.done [#allocation3], 1024
    $region33: #{vsfd_forward.1} parent=1 // pred_fallthru
      _
    // Predicated region
    $region34: #{vsfd_forward.1} parent=1 // pred_check
      _
    $region35: #{vsfd_forward.1} parent=1 // pred_check_branch
      %52 = sbr.rel (0) target = $region37
    $region36: #{vsfd_forward.1} parent=1 // pred_region
      %53 = dma.done [#allocation5], 1024
    $region37: #{vsfd_forward.1} parent=1 // pred_fallthru
      _
    %v55 = vld [vmem:[%s0] sm:$0xf]
    %v56 = vld [vmem:[%s0 + $0x4] sm:$0xf]
    %v57 = vld [vmem:[%s1] sm:$0xf]
    %v58 = vld [vmem:[%s1 + $0x4] sm:$0xf]
    %v59 = vld [vmem:[%s2] sm:$0xf]
    %v60 = vld [vmem:[%s2 + $0x4] sm:$0xf]
    %v61 = vld [vmem:[%s2 + $0x8] sm:$0xf]
    %v62 = vld [vmem:[%s2 + $0xc] sm:$0xf]
    %v63 = vld [vmem:[%s2 + $0x10] sm:$0xf]
    %v64 = vld [vmem:[%s2 + $0x14] sm:$0xf]
    %v65 = vld [vmem:[%s2 + $0x18] sm:$0xf]
    %v66 = vld [vmem:[%s2 + $0x1c] sm:$0xf]
    %v67 = vld [vmem:[%s2 + $0x20] sm:$0xf]
    %v68 = vld [vmem:[%s2 + $0x24] sm:$0xf]
    %v69 = vld [vmem:[%s2 + $0x28] sm:$0xf]
    %v70 = vld [vmem:[%s2 + $0x2c] sm:$0xf]
    %v71 = vld [vmem:[%s2 + $0x30] sm:$0xf]
    %v72 = vld [vmem:[%s2 + $0x34] sm:$0xf]
    %v73 = vld [vmem:[%s2 + $0x38] sm:$0xf]
    %v74 = vld [vmem:[%s2 + $0x3c] sm:$0xf]
    %v75 = vld [vmem:[#allocation2] sm:$0xf]
    %v76 = vld [vmem:[#allocation2 + $0x4] sm:$0xf]
    %v77 = vld [vmem:[#allocation2 + $0x8] sm:$0xf]
    %v78 = vld [vmem:[#allocation2 + $0xc] sm:$0xf]
    %v79 = vld [vmem:[#allocation2 + $0x10] sm:$0xf]
    %v80 = vld [vmem:[#allocation2 + $0x14] sm:$0xf]
    %v81 = vld [vmem:[#allocation2 + $0x18] sm:$0xf]
    %v82 = vld [vmem:[#allocation2 + $0x1c] sm:$0xf]
    %v83 = vld [vmem:[#allocation2 + $0x20] sm:$0xf]
    %v84 = vld [vmem:[#allocation2 + $0x24] sm:$0xf]
    %v85 = vld [vmem:[#allocation2 + $0x28] sm:$0xf]
    %v86 = vld [vmem:[#allocation2 + $0x2c] sm:$0xf]
    %v87 = vld [vmem:[#allocation2 + $0x30] sm:$0xf]
    %v88 = vld [vmem:[#allocation2 + $0x34] sm:$0xf]
    %v89 = vld [vmem:[#allocation2 + $0x38] sm:$0xf]
    %v90 = vld [vmem:[#allocation2 + $0x3c] sm:$0xf]
    %v93 = vunpack.c.l.b16 %v57
    %v94 = vunpack.c.l.b16 %v58
    %v95 = vpack.c.b16 %v94, %v93
    %v113 = vunpack.c.l.b16 %v75
    %v114 = vunpack.c.l.b16 %v76
    %v115 = vunpack.c.l.b16 %v77
    %v116 = vunpack.c.l.b16 %v78
    %v117 = vunpack.c.l.b16 %v79
    %v118 = vunpack.c.l.b16 %v80
    %v119 = vunpack.c.l.b16 %v81
    %v120 = vunpack.c.l.b16 %v82
    %v121 = vunpack.c.l.b16 %v83
    %v122 = vunpack.c.l.b16 %v84
    %v123 = vunpack.c.l.b16 %v85
    %v124 = vunpack.c.l.b16 %v86
    %v125 = vunpack.c.l.b16 %v87
    %v126 = vunpack.c.l.b16 %v88
    %v127 = vunpack.c.l.b16 %v89
    %v128 = vunpack.c.l.b16 %v90
    %v129 = vpack.c.b16 %v114, %v113
    %v130 = vpack.c.b16 %v116, %v115
    %v131 = vpack.c.b16 %v118, %v117
    %v132 = vpack.c.b16 %v120, %v119
    %v133 = vpack.c.b16 %v122, %v121
    %v134 = vpack.c.b16 %v124, %v123
    %v135 = vpack.c.b16 %v126, %v125
    %v136 = vpack.c.b16 %v128, %v127
    %145 = vmatprep.subr.bf16.mxu0 0
    %146 = vmatpush1.bf16.msra.mxu0 %v136
    %147 = vmatprep.subr.bf16.mxu0 0
    %148 = vmatpush1.bf16.msra.mxu0 %v135
    %149 = vmatprep.subr.bf16.mxu0 0
    %150 = vmatpush1.bf16.msra.mxu0 %v134
    %151 = vmatprep.subr.bf16.mxu0 0
    %152 = vmatpush1.bf16.msra.mxu0 %v133
    %153 = vmatprep.subr.bf16.mxu0 0
    %154 = vmatpush1.bf16.msra.mxu0 %v132
    %155 = vmatprep.subr.bf16.mxu0 0
    %156 = vmatpush1.bf16.msra.mxu0 %v131
    %157 = vmatprep.subr.bf16.mxu0 0
    %158 = vmatpush1.bf16.msra.mxu0 %v130
    %159 = vmatprep.subr.bf16.mxu0 0
    %160 = vmatpush1.bf16.msra.mxu0 %v129
    %161 = vmatprep.subr.bf16.mxu0 0
    %162 = vmatpush2.bf16.msra.mxu0 0
    %163 = vmatprep.subr.bf16.mxu0 0
    %164 = vmatpush2.bf16.msra.mxu0 0
    %165 = vmatprep.subr.bf16.mxu0 0
    %166 = vmatpush2.bf16.msra.mxu0 0
    %167 = vmatprep.subr.bf16.mxu0 0
    %168 = vmatpush2.bf16.msra.mxu0 0
    %169 = vmatprep.subr.bf16.mxu0 0
    %170 = vmatpush2.bf16.msra.mxu0 0
    %171 = vmatprep.subr.bf16.mxu0 0
    %172 = vmatpush2.bf16.msra.mxu0 0
    %173 = vmatprep.subr.bf16.mxu0 0
    %174 = vmatpush2.bf16.msra.mxu0 0
    %175 = vmatprep.subr.bf16.mxu0 0
    %176 = vmatpush2.bf16.msra.mxu0 0
    %177 = vmatprep.mubr.bf16.mxu0 0
    %178 = vmatmul.mubr.bf16.gmra.mxu0 %v95
    %v179 = vpop.f32.mrf.mxu0
    %v180 = vadd.f32 0.0, %v179
    %v181 = vpop.f32.mrf.mxu0
    %v182 = vpop.f32.mrf.mxu0
    %v183 = vadd.f32 0.0, %v182
    %v184 = vpop.f32.mrf.mxu0
    %185 = vdwg.mxu0
    %v188 = vunpack.c.l.b16 %v55
    %v189 = vunpack.c.l.b16 %v56
    %v190 = vpack.c.b16 %v189, %v188
    %v208 = vunpack.c.l.b16 %v59
    %v209 = vunpack.c.l.b16 %v60
    %v210 = vunpack.c.l.b16 %v61
    %v211 = vunpack.c.l.b16 %v62
    %v212 = vunpack.c.l.b16 %v63
    %v213 = vunpack.c.l.b16 %v64
    %v214 = vunpack.c.l.b16 %v65
    %v215 = vunpack.c.l.b16 %v66
    %v216 = vunpack.c.l.b16 %v67
    %v217 = vunpack.c.l.b16 %v68
    %v218 = vunpack.c.l.b16 %v69
    %v219 = vunpack.c.l.b16 %v70
    %v220 = vunpack.c.l.b16 %v71
    %v221 = vunpack.c.l.b16 %v72
    %v222 = vunpack.c.l.b16 %v73
    %v223 = vunpack.c.l.b16 %v74
    %v224 = vpack.c.b16 %v209, %v208
    %v225 = vpack.c.b16 %v211, %v210
    %v226 = vpack.c.b16 %v213, %v212
    %v227 = vpack.c.b16 %v215, %v214
    %v228 = vpack.c.b16 %v217, %v216
    %v229 = vpack.c.b16 %v219, %v218
    %v230 = vpack.c.b16 %v221, %v220
    %v231 = vpack.c.b16 %v223, %v222
    %240 = vmatprep.subr.bf16.mxu0 0
    %241 = vmatpush1.bf16.msra.mxu0 %v231
    %242 = vmatprep.subr.bf16.mxu0 0
    %243 = vmatpush1.bf16.msra.mxu0 %v230
    %244 = vmatprep.subr.bf16.mxu0 0
    %245 = vmatpush1.bf16.msra.mxu0 %v229
    %246 = vmatprep.subr.bf16.mxu0 0
    %247 = vmatpush1.bf16.msra.mxu0 %v228
    %248 = vmatprep.subr.bf16.mxu0 0
    %249 = vmatpush1.bf16.msra.mxu0 %v227
    %250 = vmatprep.subr.bf16.mxu0 0
    %251 = vmatpush1.bf16.msra.mxu0 %v226
    %252 = vmatprep.subr.bf16.mxu0 0
    %253 = vmatpush1.bf16.msra.mxu0 %v225
    %254 = vmatprep.subr.bf16.mxu0 0
    %255 = vmatpush1.bf16.msra.mxu0 %v224
    %256 = vmatprep.subr.bf16.mxu0 0
    %257 = vmatpush2.bf16.msra.mxu0 0
    %258 = vmatprep.subr.bf16.mxu0 0
    %259 = vmatpush2.bf16.msra.mxu0 0
    %260 = vmatprep.subr.bf16.mxu0 0
    %261 = vmatpush2.bf16.msra.mxu0 0
    %262 = vmatprep.subr.bf16.mxu0 0
    %263 = vmatpush2.bf16.msra.mxu0 0
    %264 = vmatprep.subr.bf16.mxu0 0
    %265 = vmatpush2.bf16.msra.mxu0 0
    %266 = vmatprep.subr.bf16.mxu0 0
    %267 = vmatpush2.bf16.msra.mxu0 0
    %268 = vmatprep.subr.bf16.mxu0 0
    %269 = vmatpush2.bf16.msra.mxu0 0
    %270 = vmatprep.subr.bf16.mxu0 0
    %271 = vmatpush2.bf16.msra.mxu0 0
    %272 = vmatprep.mubr.bf16.mxu0 0
    %273 = vmatmul.mubr.bf16.gmra.mxu0 %v190
    %v274 = vpop.f32.mrf.mxu0
    %v275 = vadd.f32 %v180, %v274
    %v276 = vpop.f32.mrf.mxu0
    %v277 = vpop.f32.mrf.mxu0
    %v278 = vadd.f32 %v183, %v277
    %v279 = vpop.f32.mrf.mxu0
    %280 = vdwg.mxu0
    %v281 = vld [vmem:[%s4] sm:$0x1]
    %v283 = vlaneseq
    %v284 = vshrl.u32 %v283, 7
    %v285 = vsub.s32 0, %v284
    %v286 = vrot.slane %v281, %v285
    %v288 = vadd.f32 %v275, %v286
    %v289 = vadd.f32 %v278, %v286
    %v290 = vmul.f32 %v288, 0.5
    %v291 = vmul.f32 %v289, 0.5
    %v292 = vtanh.pop %v290
    %v293 = vtanh.pop %v291
    %v294 = vmul.f32 %v292, 0.5
    %v295 = vmul.f32 %v293, 0.5
    %v296 = vadd.f32 %v294, 0.5
    %v297 = vadd.f32 %v295, 0.5
    %v298 = vunpack.c.l.bf16 %v55
    %v299 = vunpack.c.l.bf16 %v56
    %v300 = vunpack.c.l.bf16 %v57
    %v301 = vunpack.c.l.bf16 %v58
    %v302 = vsub.f32 %v298, %v300
    %v303 = vsub.f32 %v299, %v301
    %v304 = vmul.f32 %v296, %v302
    %v305 = vmul.f32 %v297, %v303
    %v306 = vadd.f32 %v300, %v304
    %v307 = vadd.f32 %v301, %v305
    %v308 = vpack.c.bf16 %v307, %v306
    %v309 = vld [vmem:[#allocation4] sm:$0xf]
    %v310 = vld [vmem:[#allocation4 + $0x4] sm:$0xf]
    %v311 = vld [vmem:[#allocation4 + $0x8] sm:$0xf]
    %v312 = vld [vmem:[#allocation4 + $0xc] sm:$0xf]
    %v313 = vld [vmem:[#allocation4 + $0x10] sm:$0xf]
    %v314 = vld [vmem:[#allocation4 + $0x14] sm:$0xf]
    %v315 = vld [vmem:[#allocation4 + $0x18] sm:$0xf]
    %v316 = vld [vmem:[#allocation4 + $0x1c] sm:$0xf]
    %v317 = vld [vmem:[#allocation4 + $0x20] sm:$0xf]
    %v318 = vld [vmem:[#allocation4 + $0x24] sm:$0xf]
    %v319 = vld [vmem:[#allocation4 + $0x28] sm:$0xf]
    %v320 = vld [vmem:[#allocation4 + $0x2c] sm:$0xf]
    %v321 = vld [vmem:[#allocation4 + $0x30] sm:$0xf]
    %v322 = vld [vmem:[#allocation4 + $0x34] sm:$0xf]
    %v323 = vld [vmem:[#allocation4 + $0x38] sm:$0xf]
    %v324 = vld [vmem:[#allocation4 + $0x3c] sm:$0xf]
    %v325 = vld [vmem:[%s6] sm:$0x1]
    %v327 = vlaneseq
    %v328 = vshrl.u32 %v327, 7
    %v329 = vsub.s32 0, %v328
    %v330 = vrot.slane %v325, %v329
    %v348 = vunpack.c.l.b16 %v309
    %v349 = vunpack.c.l.b16 %v310
    %v350 = vunpack.c.l.b16 %v311
    %v351 = vunpack.c.l.b16 %v312
    %v352 = vunpack.c.l.b16 %v313
    %v353 = vunpack.c.l.b16 %v314
    %v354 = vunpack.c.l.b16 %v315
    %v355 = vunpack.c.l.b16 %v316
    %v356 = vunpack.c.l.b16 %v317
    %v357 = vunpack.c.l.b16 %v318
    %v358 = vunpack.c.l.b16 %v319
    %v359 = vunpack.c.l.b16 %v320
    %v360 = vunpack.c.l.b16 %v321
    %v361 = vunpack.c.l.b16 %v322
    %v362 = vunpack.c.l.b16 %v323
    %v363 = vunpack.c.l.b16 %v324
    %v364 = vpack.c.b16 %v349, %v348
    %v365 = vpack.c.b16 %v351, %v350
    %v366 = vpack.c.b16 %v353, %v352
    %v367 = vpack.c.b16 %v355, %v354
    %v368 = vpack.c.b16 %v357, %v356
    %v369 = vpack.c.b16 %v359, %v358
    %v370 = vpack.c.b16 %v361, %v360
    %v371 = vpack.c.b16 %v363, %v362
    %380 = vmatprep.subr.bf16.mxu0 0
    %381 = vmatpush1.bf16.msra.mxu0 %v371
    %382 = vmatprep.subr.bf16.mxu0 0
    %383 = vmatpush1.bf16.msra.mxu0 %v370
    %384 = vmatprep.subr.bf16.mxu0 0
    %385 = vmatpush1.bf16.msra.mxu0 %v369
    %386 = vmatprep.subr.bf16.mxu0 0
    %387 = vmatpush1.bf16.msra.mxu0 %v368
    %388 = vmatprep.subr.bf16.mxu0 0
    %389 = vmatpush1.bf16.msra.mxu0 %v367
    %390 = vmatprep.subr.bf16.mxu0 0
    %391 = vmatpush1.bf16.msra.mxu0 %v366
    %392 = vmatprep.subr.bf16.mxu0 0
    %393 = vmatpush1.bf16.msra.mxu0 %v365
    %394 = vmatprep.subr.bf16.mxu0 0
    %395 = vmatpush1.bf16.msra.mxu0 %v364
    %396 = vmatprep.subr.bf16.mxu0 0
    %397 = vmatpush2.bf16.msra.mxu0 0
    %398 = vmatprep.subr.bf16.mxu0 0
    %399 = vmatpush2.bf16.msra.mxu0 0
    %400 = vmatprep.subr.bf16.mxu0 0
    %401 = vmatpush2.bf16.msra.mxu0 0
    %402 = vmatprep.subr.bf16.mxu0 0
    %403 = vmatpush2.bf16.msra.mxu0 0
    %404 = vmatprep.subr.bf16.mxu0 0
    %405 = vmatpush2.bf16.msra.mxu0 0
    %406 = vmatprep.subr.bf16.mxu0 0
    %407 = vmatpush2.bf16.msra.mxu0 0
    %408 = vmatprep.subr.bf16.mxu0 0
    %409 = vmatpush2.bf16.msra.mxu0 0
    %410 = vmatprep.subr.bf16.mxu0 0
    %411 = vmatpush2.bf16.msra.mxu0 0
    %412 = vmatprep.mubr.bf16.mxu0 0
    %413 = vmatmul.mubr.bf16.gmra.mxu0 %v308
    %v414 = vpop.f32.mrf.mxu0
    %v415 = vadd.f32 %v330, %v414
    %v416 = vpop.f32.mrf.mxu0
    %v417 = vpop.f32.mrf.mxu0
    %v418 = vadd.f32 %v330, %v417
    %v419 = vpop.f32.mrf.mxu0
    %420 = vdwg.mxu0
    %421 = vst [vmem:[%s7] sm:$0xff] %v415
    %422 = vst [vmem:[%s7 + $0x8] sm:$0xff] %v418
    // Predicated region
    $region38: #{vsfd_forward.1} parent=1 // pred_check
      _
    $region39: #{vsfd_forward.1} parent=1 // pred_check_branch
      %424 = sbr.rel (0) target = $region41
    $region40: #{vsfd_forward.1} parent=1 // pred_region
      _
    $region41: #{vsfd_forward.1} parent=1 // pred_fallthru
      _
    // Predicated region
    $region42: #{vsfd_forward.1} parent=1 // pred_check
      _
    $region43: #{vsfd_forward.1} parent=1 // pred_check_branch
      %426 = sbr.rel (0) target = $region45
    $region44: #{vsfd_forward.1} parent=1 // pred_region
      _
    $region45: #{vsfd_forward.1} parent=1 // pred_fallthru
      _
    %427 = vsyncpa [#allocation3], 1
    %428 = vsyncpa [#allocation5], 1

</llo_original>
